<compile_context>
chip_gen: v7x
topology: tpu7x:2x2x1
jax: 0.10.0
libtpu: 0.0.40
codegen_flags: <defaults>
</compile_context>

<pallas_src>
import jax
import jax.numpy as jnp
from jax.experimental import pallas as pl
from jax.experimental.pallas import tpu as pltpu


def flatten_layer(x):
    """FlattenLayer.forward: (B, ...) -> (B, prod(rest)). Metadata-only reshape."""
    return x.reshape(x.shape[0], -1)


def flatten_layer_xla_copy(x):
    """Materialized flatten via XLA's native copy (recommended when no fusion
    partner exists — a Pallas call would only add launch overhead)."""
    return jnp.copy(x.reshape(x.shape[0], -1))


def _pick_view(b, d):
    """2D row-major view of the flat B*D slab used only to define DMA chunk
    granularity.  Prefer 128-wide rows (512B / 256B / 128B per row for
    f32 / bf16 / int8 -> nicely aligned contiguous byte ranges); otherwise the
    (b, d) view.  Element order is identical to view(B, -1) either way."""
    n = b * d
    if n % 128 == 0:
        return n // 128, 128
    return b, d


def _row_chunks(rows, max_chunks):
    """Static, nearly-equal row chunks (each chunk is a contiguous byte range
    of the row-major slab)."""
    k = max(1, min(max_chunks, rows))
    base, rem = divmod(rows, k)
    chunks, start = [], 0
    for i in range(k):
        size = base + (1 if i < rem else 0)
        if size == 0:
            continue
        chunks.append((start, size))
        start += size
    return chunks


def _make_dma_copy_kernel(chunks):
    """Kernel body: issue all HBM->HBM chunk DMAs (kept in flight), then wait."""
    def kernel(x_ref, o_ref, sems):
        copies = []
        for i, (start, size) in enumerate(chunks):
            cp = pltpu.make_async_copy(
                x_ref.at[pl.ds(start, size)],
                o_ref.at[pl.ds(start, size)],
                sems.at[i],
            )
            cp.start()
            copies.append(cp)
        for cp in copies:
            cp.wait()
    return kernel


def flatten_layer_materialize(x, *, max_chunks=8):
    """Same semantics as flatten_layer, but forces a materializing HBM copy
    through a Pallas kernel that streams the data HBM->HBM with chunked DMAs
    (no VMEM staging, no grid, no vector load/store work)."""
    b = x.shape[0]
    d = 1
    for s in x.shape[1:]:
        d *= s
    n = b * d
    itemsize = jnp.dtype(x.dtype).itemsize

    rows, lanes = _pick_view(b, d)
    chunks = _row_chunks(rows, max_chunks)

    cost = pl.CostEstimate(flops=0, transcendentals=0,
                           bytes_accessed=2 * n * itemsize)

    x2 = x.reshape(rows, lanes)  # row-major: same element order as view(B, -1)

    out2 = pl.pallas_call(
        _make_dma_copy_kernel(chunks),
        out_shape=jax.ShapeDtypeStruct((rows, lanes), x.dtype),
        in_specs=[pl.BlockSpec(memory_space=pl.ANY)],   # raw HBM ref, no auto-DMA
        out_specs=pl.BlockSpec(memory_space=pl.ANY),    # raw HBM ref, no auto-DMA
        scratch_shapes=[pltpu.SemaphoreType.DMA((len(chunks),))],
        cost_estimate=cost,
    )(x2)

    return out2.reshape(b, d)


if __name__ == "__main__":
    key = jax.random.PRNGKey(0)
    # Small shapes consistent with a conv feature map: B=2, C=4, H=W=16.
    x = jax.random.normal(key, (2, 4, 16, 16), dtype=jnp.float32)

    ref = x.reshape(x.shape[0], -1)

    # Fast path (what the PyTorch module actually maps to): metadata only.
    fast = jax.block_until_ready(flatten_layer(x))

    # XLA-native materialized copy (preferred standalone copy).
    xla_copy = jax.block_until_ready(flatten_layer_xla_copy(x))

    # Pallas HBM->HBM chunked-DMA copy path, run once to exercise the kernel.
    out = jax.block_until_ready(flatten_layer_materialize(x))

    assert fast.shape == (2, 4 * 16 * 16), fast.shape
    assert out.shape == (2, 4 * 16 * 16), out.shape
    assert out.dtype == x.dtype
    assert jnp.array_equal(fast, ref)
    assert jnp.array_equal(xla_copy, ref)
    assert jnp.array_equal(out, ref)

    print("KERNEL_OK")
</pallas_src>

<mosaic_0001>
module attributes {stable_mosaic.version = 11 : i64} {
  func.func @kernel(%arg0: memref<16x128xf32, #tpu.memory_space<any>>, %arg1: memref<16x128xf32, #tpu.memory_space<any>>, %arg2: memref<8x!tpu.dma_semaphore, #tpu.memory_space<semaphore_mem>>) attributes {dimension_semantics = [], scalar_prefetch = 0 : i64, scratch_operands = 1 : i64, tpu.core_type = #tpu.core_type<tc>} {
    %c0_i32 = arith.constant 0 : i32
    %c0_i32_0 = arith.constant 0 : i32
    %c0_i32_1 = arith.constant 0 : i32
    %0 = tpu.memref_slice %arg0[%c0_i32_0, %c0_i32_1] : memref<16x128xf32, #tpu.memory_space<any>> -> memref<2x128xf32, #tpu.memory_space<any>>
    %c0_i32_2 = arith.constant 0 : i32
    %c0_i32_3 = arith.constant 0 : i32
    %1 = tpu.memref_slice %arg1[%c0_i32_2, %c0_i32_3] : memref<16x128xf32, #tpu.memory_space<any>> -> memref<2x128xf32, #tpu.memory_space<any>>
    %2 = tpu.memref_slice %arg2[%c0_i32] : memref<8x!tpu.dma_semaphore, #tpu.memory_space<semaphore_mem>> -> memref<1x!tpu.dma_semaphore, #tpu.memory_space<semaphore_mem>>
    %3 = tpu.memref_squeeze %2 : memref<1x!tpu.dma_semaphore, #tpu.memory_space<semaphore_mem>> -> memref<!tpu.dma_semaphore, #tpu.memory_space<semaphore_mem>>
    tpu.enqueue_dma source(%0 : memref<2x128xf32, #tpu.memory_space<any>>) target(%1 : memref<2x128xf32, #tpu.memory_space<any>>) target_semaphore(%3 : memref<!tpu.dma_semaphore, #tpu.memory_space<semaphore_mem>>)
    %c1_i32 = arith.constant 1 : i32
    %c2_i32 = arith.constant 2 : i32
    %c0_i32_4 = arith.constant 0 : i32
    %4 = tpu.memref_slice %arg0[%c2_i32, %c0_i32_4] : memref<16x128xf32, #tpu.memory_space<any>> -> memref<2x128xf32, #tpu.memory_space<any>>
    %c2_i32_5 = arith.constant 2 : i32
    %c0_i32_6 = arith.constant 0 : i32
    %5 = tpu.memref_slice %arg1[%c2_i32_5, %c0_i32_6] : memref<16x128xf32, #tpu.memory_space<any>> -> memref<2x128xf32, #tpu.memory_space<any>>
    %6 = tpu.memref_slice %arg2[%c1_i32] : memref<8x!tpu.dma_semaphore, #tpu.memory_space<semaphore_mem>> -> memref<1x!tpu.dma_semaphore, #tpu.memory_space<semaphore_mem>>
    %7 = tpu.memref_squeeze %6 : memref<1x!tpu.dma_semaphore, #tpu.memory_space<semaphore_mem>> -> memref<!tpu.dma_semaphore, #tpu.memory_space<semaphore_mem>>
    tpu.enqueue_dma source(%4 : memref<2x128xf32, #tpu.memory_space<any>>) target(%5 : memref<2x128xf32, #tpu.memory_space<any>>) target_semaphore(%7 : memref<!tpu.dma_semaphore, #tpu.memory_space<semaphore_mem>>)
    %c2_i32_7 = arith.constant 2 : i32
    %c4_i32 = arith.constant 4 : i32
    %c0_i32_8 = arith.constant 0 : i32
    %8 = tpu.memref_slice %arg0[%c4_i32, %c0_i32_8] : memref<16x128xf32, #tpu.memory_space<any>> -> memref<2x128xf32, #tpu.memory_space<any>>
    %c4_i32_9 = arith.constant 4 : i32
    %c0_i32_10 = arith.constant 0 : i32
    %9 = tpu.memref_slice %arg1[%c4_i32_9, %c0_i32_10] : memref<16x128xf32, #tpu.memory_space<any>> -> memref<2x128xf32, #tpu.memory_space<any>>
    %10 = tpu.memref_slice %arg2[%c2_i32_7] : memref<8x!tpu.dma_semaphore, #tpu.memory_space<semaphore_mem>> -> memref<1x!tpu.dma_semaphore, #tpu.memory_space<semaphore_mem>>
    %11 = tpu.memref_squeeze %10 : memref<1x!tpu.dma_semaphore, #tpu.memory_space<semaphore_mem>> -> memref<!tpu.dma_semaphore, #tpu.memory_space<semaphore_mem>>
    tpu.enqueue_dma source(%8 : memref<2x128xf32, #tpu.memory_space<any>>) target(%9 : memref<2x128xf32, #tpu.memory_space<any>>) target_semaphore(%11 : memref<!tpu.dma_semaphore, #tpu.memory_space<semaphore_mem>>)
    %c3_i32 = arith.constant 3 : i32
    %c6_i32 = arith.constant 6 : i32
    %c0_i32_11 = arith.constant 0 : i32
    %12 = tpu.memref_slice %arg0[%c6_i32, %c0_i32_11] : memref<16x128xf32, #tpu.memory_space<any>> -> memref<2x128xf32, #tpu.memory_space<any>>
    %c6_i32_12 = arith.constant 6 : i32
    %c0_i32_13 = arith.constant 0 : i32
    %13 = tpu.memref_slice %arg1[%c6_i32_12, %c0_i32_13] : memref<16x128xf32, #tpu.memory_space<any>> -> memref<2x128xf32, #tpu.memory_space<any>>
    %14 = tpu.memref_slice %arg2[%c3_i32] : memref<8x!tpu.dma_semaphore, #tpu.memory_space<semaphore_mem>> -> memref<1x!tpu.dma_semaphore, #tpu.memory_space<semaphore_mem>>
    %15 = tpu.memref_squeeze %14 : memref<1x!tpu.dma_semaphore, #tpu.memory_space<semaphore_mem>> -> memref<!tpu.dma_semaphore, #tpu.memory_space<semaphore_mem>>
    tpu.enqueue_dma source(%12 : memref<2x128xf32, #tpu.memory_space<any>>) target(%13 : memref<2x128xf32, #tpu.memory_space<any>>) target_semaphore(%15 : memref<!tpu.dma_semaphore, #tpu.memory_space<semaphore_mem>>)
    %c4_i32_14 = arith.constant 4 : i32
    %c8_i32 = arith.constant 8 : i32
    %c0_i32_15 = arith.constant 0 : i32
    %16 = tpu.memref_slice %arg0[%c8_i32, %c0_i32_15] : memref<16x128xf32, #tpu.memory_space<any>> -> memref<2x128xf32, #tpu.memory_space<any>>
    %c8_i32_16 = arith.constant 8 : i32
    %c0_i32_17 = arith.constant 0 : i32
    %17 = tpu.memref_slice %arg1[%c8_i32_16, %c0_i32_17] : memref<16x128xf32, #tpu.memory_space<any>> -> memref<2x128xf32, #tpu.memory_space<any>>
    %18 = tpu.memref_slice %arg2[%c4_i32_14] : memref<8x!tpu.dma_semaphore, #tpu.memory_space<semaphore_mem>> -> memref<1x!tpu.dma_semaphore, #tpu.memory_space<semaphore_mem>>
    %19 = tpu.memref_squeeze %18 : memref<1x!tpu.dma_semaphore, #tpu.memory_space<semaphore_mem>> -> memref<!tpu.dma_semaphore, #tpu.memory_space<semaphore_mem>>
    tpu.enqueue_dma source(%16 : memref<2x128xf32, #tpu.memory_space<any>>) target(%17 : memref<2x128xf32, #tpu.memory_space<any>>) target_semaphore(%19 : memref<!tpu.dma_semaphore, #tpu.memory_space<semaphore_mem>>)
    %c5_i32 = arith.constant 5 : i32
    %c10_i32 = arith.constant 10 : i32
    %c0_i32_18 = arith.constant 0 : i32
    %20 = tpu.memref_slice %arg0[%c10_i32, %c0_i32_18] : memref<16x128xf32, #tpu.memory_space<any>> -> memref<2x128xf32, #tpu.memory_space<any>>
    %c10_i32_19 = arith.constant 10 : i32
    %c0_i32_20 = arith.constant 0 : i32
    %21 = tpu.memref_slice %arg1[%c10_i32_19, %c0_i32_20] : memref<16x128xf32, #tpu.memory_space<any>> -> memref<2x128xf32, #tpu.memory_space<any>>
    %22 = tpu.memref_slice %arg2[%c5_i32] : memref<8x!tpu.dma_semaphore, #tpu.memory_space<semaphore_mem>> -> memref<1x!tpu.dma_semaphore, #tpu.memory_space<semaphore_mem>>
    %23 = tpu.memref_squeeze %22 : memref<1x!tpu.dma_semaphore, #tpu.memory_space<semaphore_mem>> -> memref<!tpu.dma_semaphore, #tpu.memory_space<semaphore_mem>>
    tpu.enqueue_dma source(%20 : memref<2x128xf32, #tpu.memory_space<any>>) target(%21 : memref<2x128xf32, #tpu.memory_space<any>>) target_semaphore(%23 : memref<!tpu.dma_semaphore, #tpu.memory_space<semaphore_mem>>)
    %c6_i32_21 = arith.constant 6 : i32
    %c12_i32 = arith.constant 12 : i32
    %c0_i32_22 = arith.constant 0 : i32
    %24 = tpu.memref_slice %arg0[%c12_i32, %c0_i32_22] : memref<16x128xf32, #tpu.memory_space<any>> -> memref<2x128xf32, #tpu.memory_space<any>>
    %c12_i32_23 = arith.constant 12 : i32
    %c0_i32_24 = arith.constant 0 : i32
    %25 = tpu.memref_slice %arg1[%c12_i32_23, %c0_i32_24] : memref<16x128xf32, #tpu.memory_space<any>> -> memref<2x128xf32, #tpu.memory_space<any>>
    %26 = tpu.memref_slice %arg2[%c6_i32_21] : memref<8x!tpu.dma_semaphore, #tpu.memory_space<semaphore_mem>> -> memref<1x!tpu.dma_semaphore, #tpu.memory_space<semaphore_mem>>
    %27 = tpu.memref_squeeze %26 : memref<1x!tpu.dma_semaphore, #tpu.memory_space<semaphore_mem>> -> memref<!tpu.dma_semaphore, #tpu.memory_space<semaphore_mem>>
    tpu.enqueue_dma source(%24 : memref<2x128xf32, #tpu.memory_space<any>>) target(%25 : memref<2x128xf32, #tpu.memory_space<any>>) target_semaphore(%27 : memref<!tpu.dma_semaphore, #tpu.memory_space<semaphore_mem>>)
    %c7_i32 = arith.constant 7 : i32
    %c14_i32 = arith.constant 14 : i32
    %c0_i32_25 = arith.constant 0 : i32
    %28 = tpu.memref_slice %arg0[%c14_i32, %c0_i32_25] : memref<16x128xf32, #tpu.memory_space<any>> -> memref<2x128xf32, #tpu.memory_space<any>>
    %c14_i32_26 = arith.constant 14 : i32
    %c0_i32_27 = arith.constant 0 : i32
    %29 = tpu.memref_slice %arg1[%c14_i32_26, %c0_i32_27] : memref<16x128xf32, #tpu.memory_space<any>> -> memref<2x128xf32, #tpu.memory_space<any>>
    %30 = tpu.memref_slice %arg2[%c7_i32] : memref<8x!tpu.dma_semaphore, #tpu.memory_space<semaphore_mem>> -> memref<1x!tpu.dma_semaphore, #tpu.memory_space<semaphore_mem>>
    %31 = tpu.memref_squeeze %30 : memref<1x!tpu.dma_semaphore, #tpu.memory_space<semaphore_mem>> -> memref<!tpu.dma_semaphore, #tpu.memory_space<semaphore_mem>>
    tpu.enqueue_dma source(%28 : memref<2x128xf32, #tpu.memory_space<any>>) target(%29 : memref<2x128xf32, #tpu.memory_space<any>>) target_semaphore(%31 : memref<!tpu.dma_semaphore, #tpu.memory_space<semaphore_mem>>)
    %c0_i32_28 = arith.constant 0 : i32
    %c0_i32_29 = arith.constant 0 : i32
    %c0_i32_30 = arith.constant 0 : i32
    %32 = tpu.memref_slice %arg0[%c0_i32_29, %c0_i32_30] : memref<16x128xf32, #tpu.memory_space<any>> -> memref<2x128xf32, #tpu.memory_space<any>>
    %c0_i32_31 = arith.constant 0 : i32
    %c0_i32_32 = arith.constant 0 : i32
    %33 = tpu.memref_slice %arg1[%c0_i32_31, %c0_i32_32] : memref<16x128xf32, #tpu.memory_space<any>> -> memref<2x128xf32, #tpu.memory_space<any>>
    %34 = tpu.memref_slice %arg2[%c0_i32_28] : memref<8x!tpu.dma_semaphore, #tpu.memory_space<semaphore_mem>> -> memref<1x!tpu.dma_semaphore, #tpu.memory_space<semaphore_mem>>
    %35 = tpu.memref_squeeze %34 : memref<1x!tpu.dma_semaphore, #tpu.memory_space<semaphore_mem>> -> memref<!tpu.dma_semaphore, #tpu.memory_space<semaphore_mem>>
    tpu.wait_dma2 semaphore(%35 : memref<!tpu.dma_semaphore, #tpu.memory_space<semaphore_mem>>) src(%32 : memref<2x128xf32, #tpu.memory_space<any>>) dst(%33 : memref<2x128xf32, #tpu.memory_space<any>>)
    %c1_i32_33 = arith.constant 1 : i32
    %c2_i32_34 = arith.constant 2 : i32
    %c0_i32_35 = arith.constant 0 : i32
    %36 = tpu.memref_slice %arg0[%c2_i32_34, %c0_i32_35] : memref<16x128xf32, #tpu.memory_space<any>> -> memref<2x128xf32, #tpu.memory_space<any>>
    %c2_i32_36 = arith.constant 2 : i32
    %c0_i32_37 = arith.constant 0 : i32
    %37 = tpu.memref_slice %arg1[%c2_i32_36, %c0_i32_37] : memref<16x128xf32, #tpu.memory_space<any>> -> memref<2x128xf32, #tpu.memory_space<any>>
    %38 = tpu.memref_slice %arg2[%c1_i32_33] : memref<8x!tpu.dma_semaphore, #tpu.memory_space<semaphore_mem>> -> memref<1x!tpu.dma_semaphore, #tpu.memory_space<semaphore_mem>>
    %39 = tpu.memref_squeeze %38 : memref<1x!tpu.dma_semaphore, #tpu.memory_space<semaphore_mem>> -> memref<!tpu.dma_semaphore, #tpu.memory_space<semaphore_mem>>
    tpu.wait_dma2 semaphore(%39 : memref<!tpu.dma_semaphore, #tpu.memory_space<semaphore_mem>>) src(%36 : memref<2x128xf32, #tpu.memory_space<any>>) dst(%37 : memref<2x128xf32, #tpu.memory_space<any>>)
    %c2_i32_38 = arith.constant 2 : i32
    %c4_i32_39 = arith.constant 4 : i32
    %c0_i32_40 = arith.constant 0 : i32
    %40 = tpu.memref_slice %arg0[%c4_i32_39, %c0_i32_40] : memref<16x128xf32, #tpu.memory_space<any>> -> memref<2x128xf32, #tpu.memory_space<any>>
    %c4_i32_41 = arith.constant 4 : i32
    %c0_i32_42 = arith.constant 0 : i32
    %41 = tpu.memref_slice %arg1[%c4_i32_41, %c0_i32_42] : memref<16x128xf32, #tpu.memory_space<any>> -> memref<2x128xf32, #tpu.memory_space<any>>
    %42 = tpu.memref_slice %arg2[%c2_i32_38] : memref<8x!tpu.dma_semaphore, #tpu.memory_space<semaphore_mem>> -> memref<1x!tpu.dma_semaphore, #tpu.memory_space<semaphore_mem>>
    %43 = tpu.memref_squeeze %42 : memref<1x!tpu.dma_semaphore, #tpu.memory_space<semaphore_mem>> -> memref<!tpu.dma_semaphore, #tpu.memory_space<semaphore_mem>>
    tpu.wait_dma2 semaphore(%43 : memref<!tpu.dma_semaphore, #tpu.memory_space<semaphore_mem>>) src(%40 : memref<2x128xf32, #tpu.memory_space<any>>) dst(%41 : memref<2x128xf32, #tpu.memory_space<any>>)
    %c3_i32_43 = arith.constant 3 : i32
    %c6_i32_44 = arith.constant 6 : i32
    %c0_i32_45 = arith.constant 0 : i32
    %44 = tpu.memref_slice %arg0[%c6_i32_44, %c0_i32_45] : memref<16x128xf32, #tpu.memory_space<any>> -> memref<2x128xf32, #tpu.memory_space<any>>
    %c6_i32_46 = arith.constant 6 : i32
    %c0_i32_47 = arith.constant 0 : i32
    %45 = tpu.memref_slice %arg1[%c6_i32_46, %c0_i32_47] : memref<16x128xf32, #tpu.memory_space<any>> -> memref<2x128xf32, #tpu.memory_space<any>>
    %46 = tpu.memref_slice %arg2[%c3_i32_43] : memref<8x!tpu.dma_semaphore, #tpu.memory_space<semaphore_mem>> -> memref<1x!tpu.dma_semaphore, #tpu.memory_space<semaphore_mem>>
    %47 = tpu.memref_squeeze %46 : memref<1x!tpu.dma_semaphore, #tpu.memory_space<semaphore_mem>> -> memref<!tpu.dma_semaphore, #tpu.memory_space<semaphore_mem>>
    tpu.wait_dma2 semaphore(%47 : memref<!tpu.dma_semaphore, #tpu.memory_space<semaphore_mem>>) src(%44 : memref<2x128xf32, #tpu.memory_space<any>>) dst(%45 : memref<2x128xf32, #tpu.memory_space<any>>)
    %c4_i32_48 = arith.constant 4 : i32
    %c8_i32_49 = arith.constant 8 : i32
    %c0_i32_50 = arith.constant 0 : i32
    %48 = tpu.memref_slice %arg0[%c8_i32_49, %c0_i32_50] : memref<16x128xf32, #tpu.memory_space<any>> -> memref<2x128xf32, #tpu.memory_space<any>>
    %c8_i32_51 = arith.constant 8 : i32
    %c0_i32_52 = arith.constant 0 : i32
    %49 = tpu.memref_slice %arg1[%c8_i32_51, %c0_i32_52] : memref<16x128xf32, #tpu.memory_space<any>> -> memref<2x128xf32, #tpu.memory_space<any>>
    %50 = tpu.memref_slice %arg2[%c4_i32_48] : memref<8x!tpu.dma_semaphore, #tpu.memory_space<semaphore_mem>> -> memref<1x!tpu.dma_semaphore, #tpu.memory_space<semaphore_mem>>
    %51 = tpu.memref_squeeze %50 : memref<1x!tpu.dma_semaphore, #tpu.memory_space<semaphore_mem>> -> memref<!tpu.dma_semaphore, #tpu.memory_space<semaphore_mem>>
    tpu.wait_dma2 semaphore(%51 : memref<!tpu.dma_semaphore, #tpu.memory_space<semaphore_mem>>) src(%48 : memref<2x128xf32, #tpu.memory_space<any>>) dst(%49 : memref<2x128xf32, #tpu.memory_space<any>>)
    %c5_i32_53 = arith.constant 5 : i32
    %c10_i32_54 = arith.constant 10 : i32
    %c0_i32_55 = arith.constant 0 : i32
    %52 = tpu.memref_slice %arg0[%c10_i32_54, %c0_i32_55] : memref<16x128xf32, #tpu.memory_space<any>> -> memref<2x128xf32, #tpu.memory_space<any>>
    %c10_i32_56 = arith.constant 10 : i32
    %c0_i32_57 = arith.constant 0 : i32
    %53 = tpu.memref_slice %arg1[%c10_i32_56, %c0_i32_57] : memref<16x128xf32, #tpu.memory_space<any>> -> memref<2x128xf32, #tpu.memory_space<any>>
    %54 = tpu.memref_slice %arg2[%c5_i32_53] : memref<8x!tpu.dma_semaphore, #tpu.memory_space<semaphore_mem>> -> memref<1x!tpu.dma_semaphore, #tpu.memory_space<semaphore_mem>>
    %55 = tpu.memref_squeeze %54 : memref<1x!tpu.dma_semaphore, #tpu.memory_space<semaphore_mem>> -> memref<!tpu.dma_semaphore, #tpu.memory_space<semaphore_mem>>
    tpu.wait_dma2 semaphore(%55 : memref<!tpu.dma_semaphore, #tpu.memory_space<semaphore_mem>>) src(%52 : memref<2x128xf32, #tpu.memory_space<any>>) dst(%53 : memref<2x128xf32, #tpu.memory_space<any>>)
    %c6_i32_58 = arith.constant 6 : i32
    %c12_i32_59 = arith.constant 12 : i32
    %c0_i32_60 = arith.constant 0 : i32
    %56 = tpu.memref_slice %arg0[%c12_i32_59, %c0_i32_60] : memref<16x128xf32, #tpu.memory_space<any>> -> memref<2x128xf32, #tpu.memory_space<any>>
    %c12_i32_61 = arith.constant 12 : i32
    %c0_i32_62 = arith.constant 0 : i32
    %57 = tpu.memref_slice %arg1[%c12_i32_61, %c0_i32_62] : memref<16x128xf32, #tpu.memory_space<any>> -> memref<2x128xf32, #tpu.memory_space<any>>
    %58 = tpu.memref_slice %arg2[%c6_i32_58] : memref<8x!tpu.dma_semaphore, #tpu.memory_space<semaphore_mem>> -> memref<1x!tpu.dma_semaphore, #tpu.memory_space<semaphore_mem>>
    %59 = tpu.memref_squeeze %58 : memref<1x!tpu.dma_semaphore, #tpu.memory_space<semaphore_mem>> -> memref<!tpu.dma_semaphore, #tpu.memory_space<semaphore_mem>>
    tpu.wait_dma2 semaphore(%59 : memref<!tpu.dma_semaphore, #tpu.memory_space<semaphore_mem>>) src(%56 : memref<2x128xf32, #tpu.memory_space<any>>) dst(%57 : memref<2x128xf32, #tpu.memory_space<any>>)
    %c7_i32_63 = arith.constant 7 : i32
    %c14_i32_64 = arith.constant 14 : i32
    %c0_i32_65 = arith.constant 0 : i32
    %60 = tpu.memref_slice %arg0[%c14_i32_64, %c0_i32_65] : memref<16x128xf32, #tpu.memory_space<any>> -> memref<2x128xf32, #tpu.memory_space<any>>
    %c14_i32_66 = arith.constant 14 : i32
    %c0_i32_67 = arith.constant 0 : i32
    %61 = tpu.memref_slice %arg1[%c14_i32_66, %c0_i32_67] : memref<16x128xf32, #tpu.memory_space<any>> -> memref<2x128xf32, #tpu.memory_space<any>>
    %62 = tpu.memref_slice %arg2[%c7_i32_63] : memref<8x!tpu.dma_semaphore, #tpu.memory_space<semaphore_mem>> -> memref<1x!tpu.dma_semaphore, #tpu.memory_space<semaphore_mem>>
    %63 = tpu.memref_squeeze %62 : memref<1x!tpu.dma_semaphore, #tpu.memory_space<semaphore_mem>> -> memref<!tpu.dma_semaphore, #tpu.memory_space<semaphore_mem>>
    tpu.wait_dma2 semaphore(%63 : memref<!tpu.dma_semaphore, #tpu.memory_space<semaphore_mem>>) src(%60 : memref<2x128xf32, #tpu.memory_space<any>>) dst(%61 : memref<2x128xf32, #tpu.memory_space<any>>)
    return
  }
}

</mosaic_0001>

<llo_original>
// kernel: tpu_custom_call.1
$region0: #{tpu_custom_call.1}
  #allocation0 [shape = 'u32[]', space=smem, size = 0x4, offset = 0x4, fixed_abs, tag = 'smem constant byte address 0x4 - core index']
  #allocation1 [shape = 'u32[144,128]{1,0:T(1,128)}', space=vmem, size = 0x12000, scoped, tag = 'internal scratch']
  #allocation2 [shape = 's32[8]{0}', space=sflag, size = 0x20, scoped, tag = 'scratch operand']
  #allocation3 [shape = 's32[]', space=sflag, size = 0x4, offset = 0, fixed_abs, tag = 'sflag constant byte address 0x0 - dummy sync flag']
  #allocation4 [shape = 'u32[0]{0}', space=smem, size = 0, offset = 0, fixed_abs, tag = 'smem constant byte address 0x0 - null']
  #allocation5 [shape = 's32[]', space=sflag, size = 0x4, offset = 0, fixed_abs, tag = 'sflag constant byte address 0x0 - dummy sync flag']
  #allocation6 [shape = 'u32[0]{0}', space=smem, size = 0, offset = 0, fixed_abs, tag = 'smem constant byte address 0x0 - null']
  #allocation7 [shape = 's32[]', space=sflag, size = 0x4, offset = 0, fixed_abs, tag = 'sflag constant byte address 0x0 - dummy sync flag']
  #allocation8 [shape = 'u32[0]{0}', space=smem, size = 0, offset = 0, fixed_abs, tag = 'smem constant byte address 0x0 - null']
  #allocation9 [shape = 's32[]', space=sflag, size = 0x4, offset = 0, fixed_abs, tag = 'sflag constant byte address 0x0 - dummy sync flag']
  #allocation10 [shape = 'u32[0]{0}', space=smem, size = 0, offset = 0, fixed_abs, tag = 'smem constant byte address 0x0 - null']
  #allocation11 [shape = 's32[]', space=sflag, size = 0x4, offset = 0, fixed_abs, tag = 'sflag constant byte address 0x0 - dummy sync flag']
  #allocation12 [shape = 'u32[0]{0}', space=smem, size = 0, offset = 0, fixed_abs, tag = 'smem constant byte address 0x0 - null']
  #allocation13 [shape = 's32[]', space=sflag, size = 0x4, offset = 0, fixed_abs, tag = 'sflag constant byte address 0x0 - dummy sync flag']
  #allocation14 [shape = 'u32[0]{0}', space=smem, size = 0, offset = 0, fixed_abs, tag = 'smem constant byte address 0x0 - null']
  #allocation15 [shape = 's32[]', space=sflag, size = 0x4, offset = 0, fixed_abs, tag = 'sflag constant byte address 0x0 - dummy sync flag']
  #allocation16 [shape = 'u32[0]{0}', space=smem, size = 0, offset = 0, fixed_abs, tag = 'smem constant byte address 0x0 - null']
  #allocation17 [shape = 's32[]', space=sflag, size = 0x4, offset = 0, fixed_abs, tag = 'sflag constant byte address 0x0 - dummy sync flag']
  #allocation18 [shape = 'u32[0]{0}', space=smem, size = 0, offset = 0, fixed_abs, tag = 'smem constant byte address 0x0 - null']
  %s0 = inlined_call_operand.hbm [shape: f32[16,128], index: 0, kind: input, shape index: {}]
  %s1 = inlined_call_operand.hbm [shape: f32[16,128], index: 1, kind: output, shape index: {}]
  %s2 = sld [smem:[#allocation0]]
  $region2: #{tpu_custom_call.1} parent=0
    _
  %s4 = ssub.s32 1, %s2
  %s5 = scalar_select 0, %s4, %s2
  %s7 = sshll.u32 1, 14
  %s8 = sxor.u32 4294967295, %s7
  %s11 = sshll.u32 3, 24
  %s12 = sxor.u32 4294967295, %s11
  %s13 = sand.u32 0, %s12
  %s15 = sor.u32 %s13, 0
  %18 = dma.general %s0, 32, %s1, [#allocation2], [#allocation3], [#allocation4], %s15, 0
  %s19 = scalar_lea.hbm %s0, 32
  %s20 = scalar_lea.hbm %s1, 32
  %s21 = scalar_lea.sflag [#allocation2], 1
  %s23 = sshll.u32 1, 14
  %s24 = sxor.u32 4294967295, %s23
  %s27 = sshll.u32 3, 24
  %s28 = sxor.u32 4294967295, %s27
  %s29 = sand.u32 0, %s28
  %s31 = sor.u32 %s29, 0
  %34 = dma.general %s19, 32, %s20, %s21, [#allocation5], [#allocation6], %s31, 0
  %s35 = scalar_lea.hbm %s0, 64
  %s36 = scalar_lea.hbm %s1, 64
  %s37 = scalar_lea.sflag [#allocation2], 2
  %s39 = sshll.u32 1, 14
  %s40 = sxor.u32 4294967295, %s39
  %s43 = sshll.u32 3, 24
  %s44 = sxor.u32 4294967295, %s43
  %s45 = sand.u32 0, %s44
  %s47 = sor.u32 %s45, 0
  %50 = dma.general %s35, 32, %s36, %s37, [#allocation7], [#allocation8], %s47, 0
  %s51 = scalar_lea.hbm %s0, 96
  %s52 = scalar_lea.hbm %s1, 96
  %s53 = scalar_lea.sflag [#allocation2], 3
  %s55 = sshll.u32 1, 14
  %s56 = sxor.u32 4294967295, %s55
  %s59 = sshll.u32 3, 24
  %s60 = sxor.u32 4294967295, %s59
  %s61 = sand.u32 0, %s60
  %s63 = sor.u32 %s61, 0
  %66 = dma.general %s51, 32, %s52, %s53, [#allocation9], [#allocation10], %s63, 0
  %s67 = scalar_lea.hbm %s0, 128
  %s68 = scalar_lea.hbm %s1, 128
  %s69 = scalar_lea.sflag [#allocation2], 4
  %s71 = sshll.u32 1, 14
  %s72 = sxor.u32 4294967295, %s71
  %s75 = sshll.u32 3, 24
  %s76 = sxor.u32 4294967295, %s75
  %s77 = sand.u32 0, %s76
  %s79 = sor.u32 %s77, 0
  %82 = dma.general %s67, 32, %s68, %s69, [#allocation11], [#allocation12], %s79, 0
  %s83 = scalar_lea.hbm %s0, 160
  %s84 = scalar_lea.hbm %s1, 160
  %s85 = scalar_lea.sflag [#allocation2], 5
  %s87 = sshll.u32 1, 14
  %s88 = sxor.u32 4294967295, %s87
  %s91 = sshll.u32 3, 24
  %s92 = sxor.u32 4294967295, %s91
  %s93 = sand.u32 0, %s92
  %s95 = sor.u32 %s93, 0
  %98 = dma.general %s83, 32, %s84, %s85, [#allocation13], [#allocation14], %s95, 0
  %s99 = scalar_lea.hbm %s0, 192
  %s100 = scalar_lea.hbm %s1, 192
  %s101 = scalar_lea.sflag [#allocation2], 6
  %s103 = sshll.u32 1, 14
  %s104 = sxor.u32 4294967295, %s103
  %s107 = sshll.u32 3, 24
  %s108 = sxor.u32 4294967295, %s107
  %s109 = sand.u32 0, %s108
  %s111 = sor.u32 %s109, 0
  %114 = dma.general %s99, 32, %s100, %s101, [#allocation15], [#allocation16], %s111, 0
  %s115 = scalar_lea.hbm %s0, 224
  %s116 = scalar_lea.hbm %s1, 224
  %s117 = scalar_lea.sflag [#allocation2], 7
  %s119 = sshll.u32 1, 14
  %s120 = sxor.u32 4294967295, %s119
  %s123 = sshll.u32 3, 24
  %s124 = sxor.u32 4294967295, %s123
  %s125 = sand.u32 0, %s124
  %s127 = sor.u32 %s125, 0
  %130 = dma.general %s115, 32, %s116, %s117, [#allocation17], [#allocation18], %s127, 0
  %s131 = smul.u32 2, 1
  %s132 = sshll.u32 %s131, 4
  %133 = dma.done [#allocation2], %s132
  %s134 = sshll.u32 %s131, 4
  %135 = dma.done %s21, %s134
  %s136 = sshll.u32 %s131, 4
  %137 = dma.done %s37, %s136
  %s138 = sshll.u32 %s131, 4
  %139 = dma.done %s53, %s138
  %s140 = sshll.u32 %s131, 4
  %141 = dma.done %s69, %s140
  %s142 = sshll.u32 %s131, 4
  %143 = dma.done %s85, %s142
  %s144 = sshll.u32 %s131, 4
  %145 = dma.done %s101, %s144
  %s146 = sshll.u32 %s131, 4
  %147 = dma.done %s117, %s146
  %148 = vsyncmov [#allocation2]
  %s149 = vpop.sfrf %148
  %p150 = scmp.eq.s32.totalorder %s149, 0
  %p151 = pneg %p150
  %153 = shalt.err (%p151)
  %s154 = scalar_lea.sflag [#allocation2], 1
  %155 = vsyncmov %s154
  %s156 = vpop.sfrf %155
  %p157 = scmp.eq.s32.totalorder %s156, 0
  %p158 = pneg %p157
  %160 = shalt.err (%p158)
  %s161 = scalar_lea.sflag [#allocation2], 2
  %162 = vsyncmov %s161
  %s163 = vpop.sfrf %162
  %p164 = scmp.eq.s32.totalorder %s163, 0
  %p165 = pneg %p164
  %167 = shalt.err (%p165)
  %s168 = scalar_lea.sflag [#allocation2], 3
  %169 = vsyncmov %s168
  %s170 = vpop.sfrf %169
  %p171 = scmp.eq.s32.totalorder %s170, 0
  %p172 = pneg %p171
  %174 = shalt.err (%p172)
  %s175 = scalar_lea.sflag [#allocation2], 4
  %176 = vsyncmov %s175
  %s177 = vpop.sfrf %176
  %p178 = scmp.eq.s32.totalorder %s177, 0
  %p179 = pneg %p178
  %181 = shalt.err (%p179)
  %s182 = scalar_lea.sflag [#allocation2], 5
  %183 = vsyncmov %s182
  %s184 = vpop.sfrf %183
  %p185 = scmp.eq.s32.totalorder %s184, 0
  %p186 = pneg %p185
  %188 = shalt.err (%p186)
  %s189 = scalar_lea.sflag [#allocation2], 6
  %190 = vsyncmov %s189
  %s191 = vpop.sfrf %190
  %p192 = scmp.eq.s32.totalorder %s191, 0
  %p193 = pneg %p192
  %195 = shalt.err (%p193)
  %s196 = scalar_lea.sflag [#allocation2], 7
  %197 = vsyncmov %s196
  %s198 = vpop.sfrf %197
  %p199 = scmp.eq.s32.totalorder %s198, 0
  %p200 = pneg %p199
  %202 = shalt.err (%p200)

</llo_original>
